<compile_context>
chip_gen: v6e
topology: v6e:2x2x1
jax: 0.10.0
libtpu: 0.0.40
codegen_flags: <defaults>
</compile_context>

<pallas_src>
import functools
import math

import jax
import jax.numpy as jnp
from jax.experimental import pallas as pl
from jax.experimental.pallas import tpu as pltpu


# ---------------------------------------------------------------------------
# Kernel 1: fused QKV projection  qkv = h @ [Wq|Wk|Wv] + [bq|bk|bv]
# bf16 inputs, f32 accumulation, bf16 output.
# ---------------------------------------------------------------------------
def _qkv_proj_kernel(h_ref, w_ref, b_ref, out_ref):
    acc = jnp.dot(h_ref[...], w_ref[...], preferred_element_type=jnp.float32)
    out_ref[...] = (acc + b_ref[...].astype(jnp.float32)).astype(out_ref.dtype)


# ---------------------------------------------------------------------------
# Kernel 2: tiled masked-exp graph attention.
#   grid = (q_tiles, k_tiles); heads batched inside each step.
#   Scalar-prefetched blk_ref[i, k] != 0 gates the work for empty adj tiles.
# ---------------------------------------------------------------------------
def _graph_attn_kernel(blk_ref, adj_ref, q_ref, k_ref, v_ref, out_ref,
                       acc_wv, acc_z, *, inv_scale):
    i = pl.program_id(0)
    kk = pl.program_id(1)
    nk = pl.num_programs(1)

    @pl.when(kk == 0)
    def _():
        acc_wv[...] = jnp.zeros_like(acc_wv)
        acc_z[...] = jnp.zeros_like(acc_z)

    @pl.when(blk_ref[i, kk] != 0)          # skip fully-empty adjacency tiles
    def _():
        q = q_ref[0]                       # (H, tq, D) bf16
        k = k_ref[0]                       # (H, tk, D) bf16
        v = v_ref[0]                       # (H, tk, D) bf16
        s = jnp.einsum("hqd,hkd->hqk", q, k,
                       preferred_element_type=jnp.float32)        # (H, tq, tk)
        s = jnp.clip(s * inv_scale, -5.0, 5.0)
        mask = adj_ref[...] != 0                                  # (tq, tk)
        e = jnp.where(mask[None, :, :], jnp.exp(s), 0.0)          # f32
        acc_z[...] += jnp.sum(e, axis=-1, keepdims=True)          # (H, tq, 1)
        acc_wv[...] += jnp.einsum("hqk,hkd->hqd",
                                  e.astype(jnp.bfloat16), v,
                                  preferred_element_type=jnp.float32)

    @pl.when(kk == nk - 1)
    def _():
        # TODO(synk): like the PyTorch module, nodes with no in-edge give z=0
        # (NaN/Inf); callers are expected to provide self-loops.
        inv_z = pl.reciprocal(acc_z[...], approx=True)
        out_ref[...] = (acc_wv[...] * inv_z).astype(out_ref.dtype)


def _pick_tile(n, target, mult):
    """Largest multiple of `mult` <= target that divides n, else n (full dim)."""
    if n <= target:
        return n
    best = n
    t = mult
    while t <= target:
        if n % t == 0:
            best = t
        t += mult
    return best


def mha_f3s_forward(h, adj, params, *, num_heads, out_dim,
                    q_tile=256, k_tile=256):
    """h: (N, in_dim) float; adj: (N, N), adj[dst, src] != 0 iff edge src->dst.

    Returns (N, num_heads, out_dim) float16 == wV / z of the reference module.
    """
    N, in_dim = h.shape
    H, D = num_heads, out_dim
    HD = H * D

    # Match the module: h -> fp16, fp16 Linear params; run the MXU in bf16.
    hb = h.astype(jnp.float16).astype(jnp.bfloat16)
    w_all = jnp.concatenate([params["wq"], params["wk"], params["wv"]],
                            axis=1).astype(jnp.bfloat16)          # (in_dim, 3*H*D)
    b_all = jnp.concatenate([params["bq"], params["bk"], params["bv"]],
                            axis=0).reshape(1, 3 * HD).astype(jnp.bfloat16)

    # ---- fused QKV projection (hoisted out of the attention loop) ----
    tn = _pick_tile(N, 256, 16)
    qkv = pl.pallas_call(
        _qkv_proj_kernel,
        out_shape=jax.ShapeDtypeStruct((N, 3 * HD), jnp.bfloat16),
        grid_spec=pltpu.PrefetchScalarGridSpec(
            num_scalar_prefetch=0,
            grid=(N // tn,),
            in_specs=[
                pl.BlockSpec((tn, in_dim), lambda i: (i, 0)),
                pl.BlockSpec((in_dim, 3 * HD), lambda i: (0, 0)),
                pl.BlockSpec((1, 3 * HD), lambda i: (0, 0)),
            ],
            out_specs=pl.BlockSpec((tn, 3 * HD), lambda i: (i, 0)),
        ),
        compiler_params=pltpu.CompilerParams(
            dimension_semantics=("parallel",)),
    )(hb, w_all, b_all)

    # (N, 3HD) -> (3, H, N, D): tiny O(N*H*D) relayout so the attention kernel
    # reads head-major (H, tile, D) blocks (same structure as flash-attention).
    qkv3 = qkv.reshape(N, 3, H, D).transpose(1, 2, 0, 3)

    # ---- tiled attention ----
    tq = _pick_tile(N, q_tile, 32)     # sublane-aligned for f32/bf16/int8 tiles
    tk = _pick_tile(N, k_tile, 128)    # lane-aligned adjacency tiles
    nq, nk = N // tq, N // tk

    adj_i8 = (adj != 0).astype(jnp.int8)    # 1 byte/entry HBM stream (4x less DMA)
    # Per-(q_tile, k_tile) nonzero map -> SMEM via scalar prefetch (dense
    # stand-in for the f3s RowWindow / TCblock bitmap metadata).
    blk_mask = jnp.any(adj_i8.reshape(nq, tq, nk, tk) != 0,
                       axis=(1, 3)).astype(jnp.int32)

    kernel = functools.partial(_graph_attn_kernel,
                               inv_scale=1.0 / math.sqrt(out_dim))

    out_hnd = pl.pallas_call(
        kernel,
        out_shape=jax.ShapeDtypeStruct((H, N, D), jnp.float16),
        grid_spec=pltpu.PrefetchScalarGridSpec(
            num_scalar_prefetch=1,
            grid=(nq, nk),                                   # reduction axis last
            in_specs=[
                pl.BlockSpec((tq, tk), lambda i, k, blk: (i, k)),            # adj
                pl.BlockSpec((1, H, tq, D), lambda i, k, blk: (0, 0, i, 0)), # Q
                pl.BlockSpec((1, H, tk, D), lambda i, k, blk: (1, 0, k, 0)), # K
                pl.BlockSpec((1, H, tk, D), lambda i, k, blk: (2, 0, k, 0)), # V
            ],
            out_specs=pl.BlockSpec((H, tq, D), lambda i, k, blk: (0, i, 0)),
            scratch_shapes=[
                pltpu.VMEM((H, tq, D), jnp.float32),   # wV accumulator
                pltpu.VMEM((H, tq, 1), jnp.float32),   # z accumulator
            ],
        ),
        compiler_params=pltpu.CompilerParams(
            dimension_semantics=("parallel", "arbitrary")),
    )(blk_mask, adj_i8, qkv3, qkv3, qkv3)

    # Cheap O(N*H*D) layout fix kept outside the kernel so the kernel stores a
    # full, aligned (H, tq, D) block; negligible next to the O(N^2) attention.
    return jnp.transpose(out_hnd, (1, 0, 2))


def init_params(key, in_dim, out_dim, num_heads):
    """Deterministic nn.Linear-style init (uniform +/- 1/sqrt(in_dim)), fp16."""
    H, D = num_heads, out_dim
    bound = 1.0 / math.sqrt(in_dim)
    ks = jax.random.split(key, 6)

    def lin(kw, kb):
        w = jax.random.uniform(kw, (in_dim, H * D), jnp.float32, -bound, bound)
        b = jax.random.uniform(kb, (H * D,), jnp.float32, -bound, bound)
        return w.astype(jnp.float16), b.astype(jnp.float16)

    wq, bq = lin(ks[0], ks[1])
    wk, bk = lin(ks[2], ks[3])
    wv, bv = lin(ks[4], ks[5])
    return {"wq": wq, "bq": bq, "wk": wk, "bk": bk, "wv": wv, "bv": bv}


def reference(h, adj, params, *, num_heads, out_dim):
    """Pure-JAX f32 reference of the graph attention (for the sanity check)."""
    N = h.shape[0]
    H, D = num_heads, out_dim
    hf = h.astype(jnp.float16).astype(jnp.float32)

    def proj(w, b):
        return (hf @ w.astype(jnp.float32)
                + b.astype(jnp.float32)).reshape(N, H, D)

    q = proj(params["wq"], params["bq"])
    k = proj(params["wk"], params["bk"])
    v = proj(params["wv"], params["bv"])
    s = jnp.einsum("ihd,jhd->hij", q, k) / math.sqrt(D)
    e = jnp.exp(jnp.clip(s, -5.0, 5.0)) * adj[None].astype(jnp.float32)
    wv = jnp.einsum("hij,jhd->ihd", e, v)                  # (N, H, D)
    z = jnp.swapaxes(jnp.sum(e, axis=-1), 0, 1)[..., None]  # (N, H, 1)
    return (wv / z).astype(jnp.float16)


if __name__ == "__main__":
    N, in_dim, out_dim, num_heads = 256, 64, 16, 4

    key = jax.random.PRNGKey(0)
    k_h, k_adj, k_p = jax.random.split(key, 3)

    h = jax.random.normal(k_h, (N, in_dim), jnp.float32)

    # Sparse-ish random graph with self loops (so z > 0 everywhere), plus one
    # completely empty 128x128 tile to exercise the block-skip path.
    adj = (jax.random.uniform(k_adj, (N, N)) < 0.15).astype(jnp.float32)
    adj = jnp.maximum(adj, jnp.eye(N, dtype=jnp.float32))
    adj = adj.at[:128, 128:].set(0.0)

    params = init_params(k_p, in_dim, out_dim, num_heads)

    out = mha_f3s_forward(h, adj, params, num_heads=num_heads,
                          out_dim=out_dim, q_tile=128, k_tile=128)
    out = jax.block_until_ready(out)

    ref = reference(h, adj, params, num_heads=num_heads, out_dim=out_dim)
    assert out.shape == (N, num_heads, out_dim)
    assert out.dtype == jnp.float16
    assert jnp.allclose(out.astype(jnp.float32), ref.astype(jnp.float32),
                        atol=5e-2, rtol=5e-2)

    print("KERNEL_OK")
</pallas_src>

<mosaic_0001>
module attributes {stable_mosaic.version = 11 : i64} {
  func.func @_qkv_proj_kernel(%arg0: i32, %arg1: memref<256x64xbf16, #tpu.memory_space<vmem>>, %arg2: memref<64x192xbf16, #tpu.memory_space<vmem>>, %arg3: memref<1x192xbf16, #tpu.memory_space<vmem>>, %arg4: memref<256x192xbf16, #tpu.memory_space<vmem>>) attributes {dimension_semantics = [#tpu.dimension_semantics<parallel>], iteration_bounds = array<i64: 1>, scalar_prefetch = 0 : i64, scratch_operands = 0 : i64, tpu.core_type = #tpu.core_type<tc>, window_params = [{transform_indices = @transform_0, window_bounds = array<i64: 256, 64>}, {pipeline_mode = #tpu.pipeline_mode<synchronous>, transform_indices = @transform_1, window_bounds = array<i64: 64, 192>}, {pipeline_mode = #tpu.pipeline_mode<synchronous>, transform_indices = @transform_2, window_bounds = array<i64: 1, 192>}, {transform_indices = @transform_3, window_bounds = array<i64: 256, 192>}]} {
    %c0 = arith.constant 0 : index
    %c0_0 = arith.constant 0 : index
    %0 = vector.load %arg1[%c0, %c0_0] : memref<256x64xbf16, #tpu.memory_space<vmem>>, vector<256x64xbf16>
    %c0_1 = arith.constant 0 : index
    %c0_2 = arith.constant 0 : index
    %1 = vector.load %arg2[%c0_1, %c0_2] : memref<64x192xbf16, #tpu.memory_space<vmem>>, vector<64x192xbf16>
    %cst = arith.constant dense<0.000000e+00> : vector<256x192xf32>
    %2 = tpu.matmul %0, %1, %cst {dimension_numbers = #tpu.dot_dimension_numbers<[1], [0], [0], [1], [0, 0, 1, 1], [], []>} : vector<256x64xbf16>, vector<64x192xbf16>, vector<256x192xf32> -> vector<256x192xf32>
    %c0_3 = arith.constant 0 : index
    %c0_4 = arith.constant 0 : index
    %3 = vector.load %arg3[%c0_3, %c0_4] : memref<1x192xbf16, #tpu.memory_space<vmem>>, vector<1x192xbf16>
    %4 = arith.extf %3 : vector<1x192xbf16> to vector<1x192xf32>
    %5 = vector.broadcast %4 : vector<1x192xf32> to vector<256x192xf32>
    %6 = arith.addf %2, %5 : vector<256x192xf32>
    %7 = arith.truncf %6 : vector<256x192xf32> to vector<256x192xbf16>
    %c0_5 = arith.constant 0 : index
    %c0_6 = arith.constant 0 : index
    %8 = vector.load %arg4[%c0_5, %c0_6] : memref<256x192xbf16, #tpu.memory_space<vmem>>, vector<256x192xbf16>
    tpu.vector_store %arg4[%c0_5, %c0_6], %7 {strides = array<i32>} : memref<256x192xbf16, #tpu.memory_space<vmem>>, vector<256x192xbf16>,
    return
  }
  func.func @transform_0(%arg0: i32) -> (i32, i32) {
    %c0_i32 = arith.constant 0 : i32
    %c0_i32_0 = arith.constant 0 : i32
    return %arg0, %c0_i32 : i32, i32
  }
  func.func @transform_1(%arg0: i32) -> (i32, i32) {
    %c0_i32 = arith.constant 0 : i32
    %c0_i32_0 = arith.constant 0 : i32
    %c0_i32_1 = arith.constant 0 : i32
    return %c0_i32, %c0_i32_0 : i32, i32
  }
  func.func @transform_2(%arg0: i32) -> (i32, i32) {
    %c0_i32 = arith.constant 0 : i32
    %c0_i32_0 = arith.constant 0 : i32
    %c0_i32_1 = arith.constant 0 : i32
    return %c0_i32, %c0_i32_0 : i32, i32
  }
  func.func @transform_3(%arg0: i32) -> (i32, i32) {
    %c0_i32 = arith.constant 0 : i32
    %c0_i32_0 = arith.constant 0 : i32
    return %arg0, %c0_i32 : i32, i32
  }
}

</mosaic_0001>

<llo_original>
// kernel: tpu_custom_call.1
$region0: #{tpu_custom_call.1}
  #allocation0 [shape = 'u32[]', space=smem, size = 0x4, offset = 0x4, fixed_abs, tag = 'smem constant byte address 0x4 - core index']
  #allocation1 [shape = 'u32[144,128]{1,0:T(1,128)}', space=vmem, size = 0x12000, scoped, tag = 'internal scratch']
  %s0 = inlined_call_operand.vmem [shape: bf16[256,64], index: 0, kind: input, shape index: {}]
  %s1 = inlined_call_operand.vmem [shape: bf16[64,192], index: 1, kind: input, shape index: {}]
  %s2 = inlined_call_operand.vmem [shape: bf16[1,192], index: 2, kind: input, shape index: {}]
  %s3 = inlined_call_operand.vmem [shape: bf16[256,192], index: 3, kind: output, shape index: {}]
  %s4 = sld [smem:[#allocation0]]
  $region22: #{tpu_custom_call.1} parent=0
    _
  %s6 = ssub.s32 1, %s4
  %s7 = scalar_select 0, %s6, %s4
  // Predicated region
  $region2: #{tpu_custom_call.1} parent=0 // pred_check
    _
  $region3: #{tpu_custom_call.1} parent=0 // pred_check_branch
    %9 = sbr.rel (0) target = $region5
  $region4: #{tpu_custom_call.1} parent=0 // pred_region
    _
  $region5: #{tpu_custom_call.1} parent=0 // pred_fallthru
    _
  // Predicated region
  $region6: #{tpu_custom_call.1} parent=0 // pred_check
    _
  $region7: #{tpu_custom_call.1} parent=0 // pred_check_branch
    %11 = sbr.rel (0) target = $region9
  $region8: #{tpu_custom_call.1} parent=0 // pred_region
    _
  $region9: #{tpu_custom_call.1} parent=0 // pred_fallthru
    _
  // Predicated region
  $region10: #{tpu_custom_call.1} parent=0 // pred_check
    _
  $region11: #{tpu_custom_call.1} parent=0 // pred_check_branch
    %13 = sbr.rel (0) target = $region13
  $region12: #{tpu_custom_call.1} parent=0 // pred_region
    _
  $region13: #{tpu_custom_call.1} parent=0 // pred_fallthru
    _
  %v15 = vld [vmem:[%s0] sm:$0xf]
  %v16 = vld [vmem:[%s0 + $0x4] sm:$0xf]
  %v17 = vld [vmem:[%s0 + $0x8] sm:$0xf]
  %v18 = vld [vmem:[%s0 + $0xc] sm:$0xf]
  %v19 = vld [vmem:[%s0 + $0x10] sm:$0xf]
  %v20 = vld [vmem:[%s0 + $0x14] sm:$0xf]
  %v21 = vld [vmem:[%s0 + $0x18] sm:$0xf]
  %v22 = vld [vmem:[%s0 + $0x1c] sm:$0xf]
  %v23 = vld [vmem:[%s0 + $0x20] sm:$0xf]
  %v24 = vld [vmem:[%s0 + $0x24] sm:$0xf]
  %v25 = vld [vmem:[%s0 + $0x28] sm:$0xf]
  %v26 = vld [vmem:[%s0 + $0x2c] sm:$0xf]
  %v27 = vld [vmem:[%s0 + $0x30] sm:$0xf]
  %v28 = vld [vmem:[%s0 + $0x34] sm:$0xf]
  %v29 = vld [vmem:[%s0 + $0x38] sm:$0xf]
  %v30 = vld [vmem:[%s0 + $0x3c] sm:$0xf]
  %v31 = vld [vmem:[%s0 + $0x40] sm:$0xf]
  %v32 = vld [vmem:[%s0 + $0x44] sm:$0xf]
  %v33 = vld [vmem:[%s0 + $0x48] sm:$0xf]
  %v34 = vld [vmem:[%s0 + $0x4c] sm:$0xf]
  %v35 = vld [vmem:[%s0 + $0x50] sm:$0xf]
  %v36 = vld [vmem:[%s0 + $0x54] sm:$0xf]
  %v37 = vld [vmem:[%s0 + $0x58] sm:$0xf]
  %v38 = vld [vmem:[%s0 + $0x5c] sm:$0xf]
  %v39 = vld [vmem:[%s0 + $0x60] sm:$0xf]
  %v40 = vld [vmem:[%s0 + $0x64] sm:$0xf]
  %v41 = vld [vmem:[%s0 + $0x68] sm:$0xf]
  %v42 = vld [vmem:[%s0 + $0x6c] sm:$0xf]
  %v43 = vld [vmem:[%s0 + $0x70] sm:$0xf]
  %v44 = vld [vmem:[%s0 + $0x74] sm:$0xf]
  %v45 = vld [vmem:[%s0 + $0x78] sm:$0xf]
  %v46 = vld [vmem:[%s0 + $0x7c] sm:$0xf]
  %v47 = vld [vmem:[%s1] sm:$0xff]
  %v48 = vld [vmem:[%s1 + $0x8] sm:$0xff]
  %v49 = vld [vmem:[%s1 + $0x10] sm:$0xff]
  %v50 = vld [vmem:[%s1 + $0x18] sm:$0xff]
  %v51 = vld [vmem:[%s1 + $0x20] sm:$0xff]
  %v52 = vld [vmem:[%s1 + $0x28] sm:$0xff]
  %v53 = vld [vmem:[%s1 + $0x30] sm:$0xff]
  %v54 = vld [vmem:[%s1 + $0x38] sm:$0xff]
  %v55 = vld [vmem:[%s2] sm:$0x3]
  %v56 = vunpack.c.l.bf16 %v55
  %v58 = vlaneseq
  %v59 = vshrl.u32 %v58, 7
  %v60 = vsub.s32 0, %v59
  %v61 = vrot.slane %v56, %v60
  %v62 = vlaneseq
  %v63 = vshrl.u32 %v62, 7
  %v64 = vsub.s32 2, %v63
  %v65 = vrot.slane %v56, %v64
  %v68 = vlaneseq
  %v69 = vshrl.u32 %v68, 7
  %v70 = vsub.s32 0, %v69
  %v71 = vrot.slane %v61, %v70
  %v72 = vlaneseq
  %v73 = vshrl.u32 %v72, 7
  %v74 = vsub.s32 0, %v73
  %v75 = vrot.slane %v65, %v74
  %v108 = vunpack.c.l.b16 %v15
  %v109 = vunpack.c.l.b16 %v16
  %v110 = vunpack.c.l.b16 %v17
  %v111 = vunpack.c.l.b16 %v18
  %v112 = vunpack.c.l.b16 %v19
  %v113 = vunpack.c.l.b16 %v20
  %v114 = vunpack.c.l.b16 %v21
  %v115 = vunpack.c.l.b16 %v22
  %v116 = vunpack.c.l.b16 %v23
  %v117 = vunpack.c.l.b16 %v24
  %v118 = vunpack.c.l.b16 %v25
  %v119 = vunpack.c.l.b16 %v26
  %v120 = vunpack.c.l.b16 %v27
  %v121 = vunpack.c.l.b16 %v28
  %v122 = vunpack.c.l.b16 %v29
  %v123 = vunpack.c.l.b16 %v30
  %v124 = vunpack.c.l.b16 %v31
  %v125 = vunpack.c.l.b16 %v32
  %v126 = vunpack.c.l.b16 %v33
  %v127 = vunpack.c.l.b16 %v34
  %v128 = vunpack.c.l.b16 %v35
  %v129 = vunpack.c.l.b16 %v36
  %v130 = vunpack.c.l.b16 %v37
  %v131 = vunpack.c.l.b16 %v38
  %v132 = vunpack.c.l.b16 %v39
  %v133 = vunpack.c.l.b16 %v40
  %v134 = vunpack.c.l.b16 %v41
  %v135 = vunpack.c.l.b16 %v42
  %v136 = vunpack.c.l.b16 %v43
  %v137 = vunpack.c.l.b16 %v44
  %v138 = vunpack.c.l.b16 %v45
  %v139 = vunpack.c.l.b16 %v46
  %v140 = vpack.c.b16 %v109, %v108
  %v141 = vpack.c.b16 %v111, %v110
  %v142 = vpack.c.b16 %v113, %v112
  %v143 = vpack.c.b16 %v115, %v114
  %v144 = vpack.c.b16 %v117, %v116
  %v145 = vpack.c.b16 %v119, %v118
  %v146 = vpack.c.b16 %v121, %v120
  %v147 = vpack.c.b16 %v123, %v122
  %v148 = vpack.c.b16 %v125, %v124
  %v149 = vpack.c.b16 %v127, %v126
  %v150 = vpack.c.b16 %v129, %v128
  %v151 = vpack.c.b16 %v131, %v130
  %v152 = vpack.c.b16 %v133, %v132
  %v153 = vpack.c.b16 %v135, %v134
  %v154 = vpack.c.b16 %v137, %v136
  %v155 = vpack.c.b16 %v139, %v138
  %v164 = vunpack.c.l.b16 %v47
  %v165 = vunpack.c.h.b16 %v47
  %v166 = vunpack.c.l.b16 %v48
  %v167 = vunpack.c.h.b16 %v48
  %v168 = vunpack.c.l.b16 %v49
  %v169 = vunpack.c.h.b16 %v49
  %v170 = vunpack.c.l.b16 %v50
  %v171 = vunpack.c.h.b16 %v50
  %v172 = vunpack.c.l.b16 %v51
  %v173 = vunpack.c.h.b16 %v51
  %v174 = vunpack.c.l.b16 %v52
  %v175 = vunpack.c.h.b16 %v52
  %v176 = vunpack.c.l.b16 %v53
  %v177 = vunpack.c.h.b16 %v53
  %v178 = vunpack.c.l.b16 %v54
  %v179 = vunpack.c.h.b16 %v54
  %v180 = vpack.c.b16 %v166, %v164
  %v181 = vpack.c.b16 %v167, %v165
  %v182 = vpack.c.b16 %v170, %v168
  %v183 = vpack.c.b16 %v171, %v169
  %v184 = vpack.c.b16 %v174, %v172
  %v185 = vpack.c.b16 %v175, %v173
  %v186 = vpack.c.b16 %v178, %v176
  %v187 = vpack.c.b16 %v179, %v177
  %vm196 = vcmask 523264
  %v198 = vsel %vm196, %v140, 0
  %v201 = vsel %vm196, %v141, 0
  %v204 = vsel %vm196, %v142, 0
  %v207 = vsel %vm196, %v143, 0
  %v210 = vsel %vm196, %v144, 0
  %v213 = vsel %vm196, %v145, 0
  %v216 = vsel %vm196, %v146, 0
  %v219 = vsel %vm196, %v147, 0
  %v222 = vsel %vm196, %v148, 0
  %v225 = vsel %vm196, %v149, 0
  %v228 = vsel %vm196, %v150, 0
  %v231 = vsel %vm196, %v151, 0
  %v234 = vsel %vm196, %v152, 0
  %v237 = vsel %vm196, %v153, 0
  %v240 = vsel %vm196, %v154, 0
  %v243 = vsel %vm196, %v155, 0
  %245 = vmatprep.subr.bf16.mxu0 0
  %246 = vmatpush1.bf16.msra.mxu0 0
  %247 = vmatprep.subr.bf16.mxu0 0
  %248 = vmatpush1.bf16.msra.mxu0 0
  %249 = vmatprep.subr.bf16.mxu0 0
  %250 = vmatpush1.bf16.msra.mxu0 0
  %251 = vmatprep.subr.bf16.mxu0 0
  %252 = vmatpush1.bf16.msra.mxu0 0
  %253 = vmatprep.subr.bf16.mxu0 %v187
  %254 = vmatpush1.bf16.msra.mxu0 %v186
  %255 = vmatprep.subr.bf16.mxu0 %v185
  %256 = vmatpush1.bf16.msra.mxu0 %v184
  %257 = vmatprep.subr.bf16.mxu0 %v183
  %258 = vmatpush1.bf16.msra.mxu0 %v182
  %259 = vmatprep.subr.bf16.mxu0 %v181
  %260 = vmatpush1.bf16.msra.mxu0 %v180
  %261 = vmatprep.subr.bf16.mxu0 0
  %262 = vmatpush2.bf16.msra.mxu0 0
  %263 = vmatprep.subr.bf16.mxu0 0
  %264 = vmatpush2.bf16.msra.mxu0 0
  %265 = vmatprep.subr.bf16.mxu0 0
  %266 = vmatpush2.bf16.msra.mxu0 0
  %267 = vmatprep.subr.bf16.mxu0 0
  %268 = vmatpush2.bf16.msra.mxu0 0
  %269 = vmatprep.subr.bf16.mxu0 0
  %270 = vmatpush2.bf16.msra.mxu0 0
  %271 = vmatprep.subr.bf16.mxu0 0
  %272 = vmatpush2.bf16.msra.mxu0 0
  %273 = vmatprep.subr.bf16.mxu0 0
  %274 = vmatpush2.bf16.msra.mxu0 0
  %275 = vmatprep.subr.bf16.mxu0 0
  %276 = vmatpush2.bf16.msra.mxu0 0
  %277 = vmatprep.mubr.bf16.mxu0 0
  %278 = vmatmul.mubr.bf16.gmra.mxu0 %v198
  %v279 = vpop.f32.mrf.mxu0
  %v280 = vadd.f32 %v71, %v279
  %v281 = vpop.f32.mrf.mxu0
  %v282 = vadd.f32 %v75, %v281
  %v283 = vpop.f32.mrf.mxu0
  %v284 = vadd.f32 %v71, %v283
  %v285 = vpop.f32.mrf.mxu0
  %v286 = vadd.f32 %v75, %v285
  %287 = vmatprep.mubr.bf16.mxu0 0
  %288 = vmatmul.mubr.bf16.gmra.mxu0 %v201
  %v289 = vpop.f32.mrf.mxu0
  %v290 = vadd.f32 %v71, %v289
  %v291 = vpop.f32.mrf.mxu0
  %v292 = vadd.f32 %v75, %v291
  %v293 = vpop.f32.mrf.mxu0
  %v294 = vadd.f32 %v71, %v293
  %v295 = vpop.f32.mrf.mxu0
  %v296 = vadd.f32 %v75, %v295
  %297 = vmatprep.mubr.bf16.mxu0 0
  %298 = vmatmul.mubr.bf16.gmra.mxu0 %v204
  %v299 = vpop.f32.mrf.mxu0
  %v300 = vadd.f32 %v71, %v299
  %v301 = vpop.f32.mrf.mxu0
  %v302 = vadd.f32 %v75, %v301
  %v303 = vpop.f32.mrf.mxu0
  %v304 = vadd.f32 %v71, %v303
  %v305 = vpop.f32.mrf.mxu0
  %v306 = vadd.f32 %v75, %v305
  %307 = vmatprep.mubr.bf16.mxu0 0
  %308 = vmatmul.mubr.bf16.gmra.mxu0 %v207
  %v309 = vpop.f32.mrf.mxu0
  %v310 = vadd.f32 %v71, %v309
  %v311 = vpop.f32.mrf.mxu0
  %v312 = vadd.f32 %v75, %v311
  %v313 = vpop.f32.mrf.mxu0
  %v314 = vadd.f32 %v71, %v313
  %v315 = vpop.f32.mrf.mxu0
  %v316 = vadd.f32 %v75, %v315
  %317 = vmatprep.mubr.bf16.mxu0 0
  %318 = vmatmul.mubr.bf16.gmra.mxu0 %v210
  %v319 = vpop.f32.mrf.mxu0
  %v320 = vadd.f32 %v71, %v319
  %v321 = vpop.f32.mrf.mxu0
  %v322 = vadd.f32 %v75, %v321
  %v323 = vpop.f32.mrf.mxu0
  %v324 = vadd.f32 %v71, %v323
  %v325 = vpop.f32.mrf.mxu0
  %v326 = vadd.f32 %v75, %v325
  %327 = vmatprep.mubr.bf16.mxu0 0
  %328 = vmatmul.mubr.bf16.gmra.mxu0 %v213
  %v329 = vpop.f32.mrf.mxu0
  %v330 = vadd.f32 %v71, %v329
  %v331 = vpop.f32.mrf.mxu0
  %v332 = vadd.f32 %v75, %v331
  %v333 = vpop.f32.mrf.mxu0
  %v334 = vadd.f32 %v71, %v333
  %v335 = vpop.f32.mrf.mxu0
  %v336 = vadd.f32 %v75, %v335
  %337 = vmatprep.mubr.bf16.mxu0 0
  %338 = vmatmul.mubr.bf16.gmra.mxu0 %v216
  %v339 = vpop.f32.mrf.mxu0
  %v340 = vadd.f32 %v71, %v339
  %v341 = vpop.f32.mrf.mxu0
  %v342 = vadd.f32 %v75, %v341
  %v343 = vpop.f32.mrf.mxu0
  %v344 = vadd.f32 %v71, %v343
  %v345 = vpop.f32.mrf.mxu0
  %v346 = vadd.f32 %v75, %v345
  %347 = vmatprep.mubr.bf16.mxu0 0
  %348 = vmatmul.mubr.bf16.gmra.mxu0 %v219
  %v349 = vpop.f32.mrf.mxu0
  %v350 = vadd.f32 %v71, %v349
  %v351 = vpop.f32.mrf.mxu0
  %v352 = vadd.f32 %v75, %v351
  %v353 = vpop.f32.mrf.mxu0
  %v354 = vadd.f32 %v71, %v353
  %v355 = vpop.f32.mrf.mxu0
  %v356 = vadd.f32 %v75, %v355
  %357 = vmatprep.mubr.bf16.mxu0 0
  %358 = vmatmul.mubr.bf16.gmra.mxu0 %v222
  %v359 = vpop.f32.mrf.mxu0
  %v360 = vadd.f32 %v71, %v359
  %v361 = vpop.f32.mrf.mxu0
  %v362 = vadd.f32 %v75, %v361
  %v363 = vpop.f32.mrf.mxu0
  %v364 = vadd.f32 %v71, %v363
  %v365 = vpop.f32.mrf.mxu0
  %v366 = vadd.f32 %v75, %v365
  %367 = vmatprep.mubr.bf16.mxu0 0
  %368 = vmatmul.mubr.bf16.gmra.mxu0 %v225
  %v369 = vpop.f32.mrf.mxu0
  %v370 = vadd.f32 %v71, %v369
  %v371 = vpop.f32.mrf.mxu0
  %v372 = vadd.f32 %v75, %v371
  %v373 = vpop.f32.mrf.mxu0
  %v374 = vadd.f32 %v71, %v373
  %v375 = vpop.f32.mrf.mxu0
  %v376 = vadd.f32 %v75, %v375
  %377 = vmatprep.mubr.bf16.mxu0 0
  %378 = vmatmul.mubr.bf16.gmra.mxu0 %v228
  %v379 = vpop.f32.mrf.mxu0
  %v380 = vadd.f32 %v71, %v379
  %v381 = vpop.f32.mrf.mxu0
  %v382 = vadd.f32 %v75, %v381
  %v383 = vpop.f32.mrf.mxu0
  %v384 = vadd.f32 %v71, %v383
  %v385 = vpop.f32.mrf.mxu0
  %v386 = vadd.f32 %v75, %v385
  %387 = vmatprep.mubr.bf16.mxu0 0
  %388 = vmatmul.mubr.bf16.gmra.mxu0 %v231
  %v389 = vpop.f32.mrf.mxu0
  %v390 = vadd.f32 %v71, %v389
  %v391 = vpop.f32.mrf.mxu0
  %v392 = vadd.f32 %v75, %v391
  %v393 = vpop.f32.mrf.mxu0
  %v394 = vadd.f32 %v71, %v393
  %v395 = vpop.f32.mrf.mxu0
  %v396 = vadd.f32 %v75, %v395
  %397 = vmatprep.mubr.bf16.mxu0 0
  %398 = vmatmul.mubr.bf16.gmra.mxu0 %v234
  %v399 = vpop.f32.mrf.mxu0
  %v400 = vadd.f32 %v71, %v399
  %v401 = vpop.f32.mrf.mxu0
  %v402 = vadd.f32 %v75, %v401
  %v403 = vpop.f32.mrf.mxu0
  %v404 = vadd.f32 %v71, %v403
  %v405 = vpop.f32.mrf.mxu0
  %v406 = vadd.f32 %v75, %v405
  %407 = vmatprep.mubr.bf16.mxu0 0
  %408 = vmatmul.mubr.bf16.gmra.mxu0 %v237
  %v409 = vpop.f32.mrf.mxu0
  %v410 = vadd.f32 %v71, %v409
  %v411 = vpop.f32.mrf.mxu0
  %v412 = vadd.f32 %v75, %v411
  %v413 = vpop.f32.mrf.mxu0
  %v414 = vadd.f32 %v71, %v413
  %v415 = vpop.f32.mrf.mxu0
  %v416 = vadd.f32 %v75, %v415
  %417 = vmatprep.mubr.bf16.mxu0 0
  %418 = vmatmul.mubr.bf16.gmra.mxu0 %v240
  %v419 = vpop.f32.mrf.mxu0
  %v420 = vadd.f32 %v71, %v419
  %v421 = vpop.f32.mrf.mxu0
  %v422 = vadd.f32 %v75, %v421
  %v423 = vpop.f32.mrf.mxu0
  %v424 = vadd.f32 %v71, %v423
  %v425 = vpop.f32.mrf.mxu0
  %v426 = vadd.f32 %v75, %v425
  %427 = vmatprep.mubr.bf16.mxu0 0
  %428 = vmatmul.mubr.bf16.gmra.mxu0 %v243
  %v429 = vpop.f32.mrf.mxu0
  %v430 = vadd.f32 %v71, %v429
  %v431 = vpop.f32.mrf.mxu0
  %v432 = vadd.f32 %v75, %v431
  %v433 = vpop.f32.mrf.mxu0
  %v434 = vadd.f32 %v71, %v433
  %v435 = vpop.f32.mrf.mxu0
  %v436 = vadd.f32 %v75, %v435
  %437 = vdwg.mxu0
  %v438 = vpack.c.bf16 %v284, %v280
  %v439 = vpack.c.bf16 %v286, %v282
  %v440 = vpack.c.bf16 %v294, %v290
  %v441 = vpack.c.bf16 %v296, %v292
  %v442 = vpack.c.bf16 %v304, %v300
  %v443 = vpack.c.bf16 %v306, %v302
  %v444 = vpack.c.bf16 %v314, %v310
  %v445 = vpack.c.bf16 %v316, %v312
  %v446 = vpack.c.bf16 %v324, %v320
  %v447 = vpack.c.bf16 %v326, %v322
  %v448 = vpack.c.bf16 %v334, %v330
  %v449 = vpack.c.bf16 %v336, %v332
  %v450 = vpack.c.bf16 %v344, %v340
  %v451 = vpack.c.bf16 %v346, %v342
  %v452 = vpack.c.bf16 %v354, %v350
  %v453 = vpack.c.bf16 %v356, %v352
  %v454 = vpack.c.bf16 %v364, %v360
  %v455 = vpack.c.bf16 %v366, %v362
  %v456 = vpack.c.bf16 %v374, %v370
  %v457 = vpack.c.bf16 %v376, %v372
  %v458 = vpack.c.bf16 %v384, %v380
  %v459 = vpack.c.bf16 %v386, %v382
  %v460 = vpack.c.bf16 %v394, %v390
  %v461 = vpack.c.bf16 %v396, %v392
  %v462 = vpack.c.bf16 %v404, %v400
  %v463 = vpack.c.bf16 %v406, %v402
  %v464 = vpack.c.bf16 %v414, %v410
  %v465 = vpack.c.bf16 %v416, %v412
  %v466 = vpack.c.bf16 %v424, %v420
  %v467 = vpack.c.bf16 %v426, %v422
  %v468 = vpack.c.bf16 %v434, %v430
  %v469 = vpack.c.bf16 %v436, %v432
  %v502 = vunpack.c.l.b16 %v438
  %v503 = vunpack.c.l.b16 %v439
  %v504 = vunpack.c.h.b16 %v438
  %v505 = vunpack.c.h.b16 %v439
  %v506 = vunpack.c.l.b16 %v440
  %v507 = vunpack.c.l.b16 %v441
  %v508 = vunpack.c.h.b16 %v440
  %v509 = vunpack.c.h.b16 %v441
  %v510 = vunpack.c.l.b16 %v442
  %v511 = vunpack.c.l.b16 %v443
  %v512 = vunpack.c.h.b16 %v442
  %v513 = vunpack.c.h.b16 %v443
  %v514 = vunpack.c.l.b16 %v444
  %v515 = vunpack.c.l.b16 %v445
  %v516 = vunpack.c.h.b16 %v444
  %v517 = vunpack.c.h.b16 %v445
  %v518 = vunpack.c.l.b16 %v446
  %v519 = vunpack.c.l.b16 %v447
  %v520 = vunpack.c.h.b16 %v446
  %v521 = vunpack.c.h.b16 %v447
  %v522 = vunpack.c.l.b16 %v448
  %v523 = vunpack.c.l.b16 %v449
  %v524 = vunpack.c.h.b16 %v448
  %v525 = vunpack.c.h.b16 %v449
  %v526 = vunpack.c.l.b16 %v450
  %v527 = vunpack.c.l.b16 %v451
  %v528 = vunpack.c.h.b16 %v450
  %v529 = vunpack.c.h.b16 %v451
  %v530 = vunpack.c.l.b16 %v452
  %v531 = vunpack.c.l.b16 %v453
  %v532 = vunpack.c.h.b16 %v452
  %v533 = vunpack.c.h.b16 %v453
  %v534 = vunpack.c.l.b16 %v454
  %v535 = vunpack.c.l.b16 %v455
  %v536 = vunpack.c.h.b16 %v454
  %v537 = vunpack.c.h.b16 %v455
  %v538 = vunpack.c.l.b16 %v456
  %v539 = vunpack.c.l.b16 %v457
  %v540 = vunpack.c.h.b16 %v456
  %v541 = vunpack.c.h.b16 %v457
  %v542 = vunpack.c.l.b16 %v458
  %v543 = vunpack.c.l.b16 %v459
  %v544 = vunpack.c.h.b16 %v458
  %v545 = vunpack.c.h.b16 %v459
  %v546 = vunpack.c.l.b16 %v460
  %v547 = vunpack.c.l.b16 %v461
  %v548 = vunpack.c.h.b16 %v460
  %v549 = vunpack.c.h.b16 %v461
  %v550 = vunpack.c.l.b16 %v462
  %v551 = vunpack.c.l.b16 %v463
  %v552 = vunpack.c.h.b16 %v462
  %v553 = vunpack.c.h.b16 %v463
  %v554 = vunpack.c.l.b16 %v464
  %v555 = vunpack.c.l.b16 %v465
  %v556 = vunpack.c.h.b16 %v464
  %v557 = vunpack.c.h.b16 %v465
  %v558 = vunpack.c.l.b16 %v466
  %v559 = vunpack.c.l.b16 %v467
  %v560 = vunpack.c.h.b16 %v466
  %v561 = vunpack.c.h.b16 %v467
  %v562 = vunpack.c.l.b16 %v468
  %v563 = vunpack.c.l.b16 %v469
  %v564 = vunpack.c.h.b16 %v468
  %v565 = vunpack.c.h.b16 %v469
  %v566 = vpack.c.b16 %v503, %v502
  %v567 = vpack.c.b16 %v505, %v504
  %v568 = vpack.c.b16 %v507, %v506
  %v569 = vpack.c.b16 %v509, %v508
  %v570 = vpack.c.b16 %v511, %v510
  %v571 = vpack.c.b16 %v513, %v512
  %v572 = vpack.c.b16 %v515, %v514
  %v573 = vpack.c.b16 %v517, %v516
  %v574 = vpack.c.b16 %v519, %v518
  %v575 = vpack.c.b16 %v521, %v520
  %v576 = vpack.c.b16 %v523, %v522
  %v577 = vpack.c.b16 %v525, %v524
  %v578 = vpack.c.b16 %v527, %v526
  %v579 = vpack.c.b16 %v529, %v528
  %v580 = vpack.c.b16 %v531, %v530
  %v581 = vpack.c.b16 %v533, %v532
  %v582 = vpack.c.b16 %v535, %v534
  %v583 = vpack.c.b16 %v537, %v536
  %v584 = vpack.c.b16 %v539, %v538
  %v585 = vpack.c.b16 %v541, %v540
  %v586 = vpack.c.b16 %v543, %v542
  %v587 = vpack.c.b16 %v545, %v544
  %v588 = vpack.c.b16 %v547, %v546
  %v589 = vpack.c.b16 %v549, %v548
  %v590 = vpack.c.b16 %v551, %v550
  %v591 = vpack.c.b16 %v553, %v552
  %v592 = vpack.c.b16 %v555, %v554
  %v593 = vpack.c.b16 %v557, %v556
  %v594 = vpack.c.b16 %v559, %v558
  %v595 = vpack.c.b16 %v561, %v560
  %v596 = vpack.c.b16 %v563, %v562
  %v597 = vpack.c.b16 %v565, %v564
  %vm630 = vcmask 1043456
  %vm631 = vcmask 523268
  %vm632 = vmor %vm631, %vm630
  %633 = vst.msk [vmem:[%s3] sm:$0xff] %vm632, %v566
  %634 = vst.msk [vmem:[%s3 + $0x8] sm:$0xff] %vm632, %v567
  %635 = vst.msk [vmem:[%s3 + $0x10] sm:$0xff] %vm632, %v568
  %636 = vst.msk [vmem:[%s3 + $0x18] sm:$0xff] %vm632, %v569
  %637 = vst.msk [vmem:[%s3 + $0x20] sm:$0xff] %vm632, %v570
  %638 = vst.msk [vmem:[%s3 + $0x28] sm:$0xff] %vm632, %v571
  %639 = vst.msk [vmem:[%s3 + $0x30] sm:$0xff] %vm632, %v572
  %640 = vst.msk [vmem:[%s3 + $0x38] sm:$0xff] %vm632, %v573
  %641 = vst.msk [vmem:[%s3 + $0x40] sm:$0xff] %vm632, %v574
  %642 = vst.msk [vmem:[%s3 + $0x48] sm:$0xff] %vm632, %v575
  %643 = vst.msk [vmem:[%s3 + $0x50] sm:$0xff] %vm632, %v576
  %644 = vst.msk [vmem:[%s3 + $0x58] sm:$0xff] %vm632, %v577
  %645 = vst.msk [vmem:[%s3 + $0x60] sm:$0xff] %vm632, %v578
  %646 = vst.msk [vmem:[%s3 + $0x68] sm:$0xff] %vm632, %v579
  %647 = vst.msk [vmem:[%s3 + $0x70] sm:$0xff] %vm632, %v580
  %648 = vst.msk [vmem:[%s3 + $0x78] sm:$0xff] %vm632, %v581
  %649 = vst.msk [vmem:[%s3 + $0x80] sm:$0xff] %vm632, %v582
  %650 = vst.msk [vmem:[%s3 + $0x88] sm:$0xff] %vm632, %v583
  %651 = vst.msk [vmem:[%s3 + $0x90] sm:$0xff] %vm632, %v584
  %652 = vst.msk [vmem:[%s3 + $0x98] sm:$0xff] %vm632, %v585
  %653 = vst.msk [vmem:[%s3 + $0xa0] sm:$0xff] %vm632, %v586
  %654 = vst.msk [vmem:[%s3 + $0xa8] sm:$0xff] %vm632, %v587
  %655 = vst.msk [vmem:[%s3 + $0xb0] sm:$0xff] %vm632, %v588
  %656 = vst.msk [vmem:[%s3 + $0xb8] sm:$0xff] %vm632, %v589
  %657 = vst.msk [vmem:[%s3 + $0xc0] sm:$0xff] %vm632, %v590
  %658 = vst.msk [vmem:[%s3 + $0xc8] sm:$0xff] %vm632, %v591
  %659 = vst.msk [vmem:[%s3 + $0xd0] sm:$0xff] %vm632, %v592
  %660 = vst.msk [vmem:[%s3 + $0xd8] sm:$0xff] %vm632, %v593
  %661 = vst.msk [vmem:[%s3 + $0xe0] sm:$0xff] %vm632, %v594
  %662 = vst.msk [vmem:[%s3 + $0xe8] sm:$0xff] %vm632, %v595
  %663 = vst.msk [vmem:[%s3 + $0xf0] sm:$0xff] %vm632, %v596
  %664 = vst.msk [vmem:[%s3 + $0xf8] sm:$0xff] %vm632, %v597
  // Predicated region
  $region14: #{tpu_custom_call.1} parent=0 // pred_check
    _
  $region15: #{tpu_custom_call.1} parent=0 // pred_check_branch
    %666 = sbr.rel (0) target = $region17
  $region16: #{tpu_custom_call.1} parent=0 // pred_region
    _
  $region17: #{tpu_custom_call.1} parent=0 // pred_fallthru
    _
  // Predicated region
  $region18: #{tpu_custom_call.1} parent=0 // pred_check
    _
  $region19: #{tpu_custom_call.1} parent=0 // pred_check_branch
    %668 = sbr.rel (0) target = $region21
  $region20: #{tpu_custom_call.1} parent=0 // pred_region
    _
  $region21: #{tpu_custom_call.1} parent=0 // pred_fallthru
    _

</llo_original>
